<compile_context>
chip_gen: v5e
topology: v5e:2x2
jax: 0.10.0
libtpu: 0.0.40
codegen_flags: <defaults>
</compile_context>

<pallas_src>
import functools

import jax
import jax.numpy as jnp
from jax.experimental import pallas as pl
from jax.experimental.pallas import tpu as pltpu


def _round_up(x, m):
    return ((x + m - 1) // m) * m


def _pad2d(x, rows, cols, dtype):
    """Zero-pad a 2-D array to (rows, cols) and cast to dtype."""
    r, c = x.shape
    out = jnp.zeros((rows, cols), dtype)
    return out.at[:r, :c].set(x.astype(dtype))


# --------------------------------------------------------------------------- #
# Kernel 1: H1pre[rows] = X[rows] @ W1   (W1 resident, one dot per row tile)  #
# --------------------------------------------------------------------------- #
def _xw_kernel(x_ref, w_ref, o_ref):
    o_ref[...] = jnp.dot(
        x_ref[...], w_ref[...],
        preferred_element_type=jnp.float32).astype(o_ref.dtype)


# --------------------------------------------------------------------------- #
# Kernel 2: H2pre[rows] = relu(A[rows] @ H1pre + b1) @ W2                     #
# --------------------------------------------------------------------------- #
def _agg_relu_mm_kernel(a_ref, h_ref, b_ref, w_ref, o_ref):
    agg = jnp.dot(a_ref[...], h_ref[...], preferred_element_type=jnp.float32)
    act = jnp.maximum(agg + b_ref[...], 0.0)
    o_ref[...] = jnp.dot(act.astype(w_ref.dtype), w_ref[...],
                         preferred_element_type=jnp.float32).astype(o_ref.dtype)


# --------------------------------------------------------------------------- #
# Kernel 3: out[rows] = log_softmax(relu(A[rows]@H2pre + b2) @ WlinT + blin)  #
# --------------------------------------------------------------------------- #
def _agg_relu_head_kernel(a_ref, h_ref, b_ref, wl_ref, bl_ref, o_ref, *,
                          num_classes):
    agg = jnp.dot(a_ref[...], h_ref[...], preferred_element_type=jnp.float32)
    act = jnp.maximum(agg + b_ref[...], 0.0)
    logits = jnp.dot(act.astype(wl_ref.dtype), wl_ref[...],
                     preferred_element_type=jnp.float32) + bl_ref[...]
    # Mask the padded class lanes so they do not affect the normalizer.
    col = jax.lax.broadcasted_iota(jnp.int32, logits.shape, 1)
    logits = jnp.where(col < num_classes, logits, -1e30)
    m = jnp.max(logits, axis=-1, keepdims=True)
    z = logits - m
    lse = jnp.log(jnp.sum(jnp.exp(z), axis=-1, keepdims=True))
    o_ref[...] = z - lse


# --------------------------------------------------------------------------- #
# Wrapper                                                                     #
# --------------------------------------------------------------------------- #
def gcn_citeseer_forward(x, a_hat, w1, b1, w2, b2, w_lin_t, b_lin, *, tm=256):
    n, f = x.shape
    h = w1.shape[1]
    c = w_lin_t.shape[1]

    n_pad = _round_up(n, tm)
    f_pad = _round_up(f, 128)
    h_pad = _round_up(h, 128)     # lane-dense hidden dim
    c_pad = _round_up(c, 128)     # lane-dense class dim

    cdt = jnp.bfloat16            # MXU operand dtype (f32 accumulation)

    x_p = _pad2d(x, n_pad, f_pad, cdt)
    a_p = _pad2d(a_hat, n_pad, n_pad, cdt)
    w1_p = _pad2d(w1, f_pad, h_pad, cdt)
    w2_p = _pad2d(w2, h_pad, h_pad, cdt)
    wl_p = _pad2d(w_lin_t, h_pad, c_pad, cdt)
    b1_p = _pad2d(b1.reshape(1, -1), 1, h_pad, jnp.float32)
    b2_p = _pad2d(b2.reshape(1, -1), 1, h_pad, jnp.float32)
    bl_p = _pad2d(b_lin.reshape(1, -1), 1, c_pad, jnp.float32)

    n_row_tiles = n_pad // tm

    vmem_cap = 48 * 1024 * 1024   # safe on v7x (64 MiB physical)
    cparams = pltpu.CompilerParams(
        dimension_semantics=("parallel",),     # row tiles shard across v7x TCs
        vmem_limit_bytes=vmem_cap)

    # ---- Kernel 1: feature transform (W1 resident, one dot per row tile) -- #
    h1pre = pl.pallas_call(
        _xw_kernel,
        out_shape=jax.ShapeDtypeStruct((n_pad, h_pad), cdt),
        grid=(n_row_tiles,),
        in_specs=[
            pl.BlockSpec((tm, f_pad), lambda i: (i, 0)),
            pl.BlockSpec((f_pad, h_pad), lambda i: (0, 0)),
        ],
        out_specs=pl.BlockSpec((tm, h_pad), lambda i: (i, 0)),
        compiler_params=cparams,
        cost_estimate=pl.CostEstimate(
            flops=2 * n_pad * f_pad * h_pad,
            transcendentals=0,
            bytes_accessed=x_p.size * 2 + w1_p.size * 2 + n_pad * h_pad * 2),
    )(x_p, w1_p)

    # ---- Kernel 2: gc1 aggregation + ReLU fused with gc2 transform -------- #
    h2pre = pl.pallas_call(
        _agg_relu_mm_kernel,
        out_shape=jax.ShapeDtypeStruct((n_pad, h_pad), cdt),
        grid=(n_row_tiles,),
        in_specs=[
            pl.BlockSpec((tm, n_pad), lambda i: (i, 0)),
            pl.BlockSpec((n_pad, h_pad), lambda i: (0, 0)),
            pl.BlockSpec((1, h_pad), lambda i: (0, 0)),
            pl.BlockSpec((h_pad, h_pad), lambda i: (0, 0)),
        ],
        out_specs=pl.BlockSpec((tm, h_pad), lambda i: (i, 0)),
        compiler_params=cparams,
        cost_estimate=pl.CostEstimate(
            flops=2 * n_pad * n_pad * h_pad + 2 * n_pad * h_pad * h_pad,
            transcendentals=0,
            bytes_accessed=a_p.size * 2 + n_pad * h_pad * 2
            + w2_p.size * 2 + n_pad * h_pad * 2),
    )(a_p, h1pre, b1_p, w2_p)

    # ---- Kernel 3: gc2 aggregation + ReLU + linear head + log_softmax ----- #
    out_padded = pl.pallas_call(
        functools.partial(_agg_relu_head_kernel, num_classes=c),
        out_shape=jax.ShapeDtypeStruct((n_pad, c_pad), jnp.float32),
        grid=(n_row_tiles,),
        in_specs=[
            pl.BlockSpec((tm, n_pad), lambda i: (i, 0)),
            pl.BlockSpec((n_pad, h_pad), lambda i: (0, 0)),
            pl.BlockSpec((1, h_pad), lambda i: (0, 0)),
            pl.BlockSpec((h_pad, c_pad), lambda i: (0, 0)),
            pl.BlockSpec((1, c_pad), lambda i: (0, 0)),
        ],
        out_specs=pl.BlockSpec((tm, c_pad), lambda i: (i, 0)),
        compiler_params=cparams,
        cost_estimate=pl.CostEstimate(
            flops=2 * n_pad * n_pad * h_pad + 2 * n_pad * h_pad * c_pad,
            transcendentals=n_pad * c_pad,
            bytes_accessed=a_p.size * 2 + n_pad * h_pad * 2
            + wl_p.size * 2 + n_pad * c_pad * 4),
    )(a_p, h2pre, b2_p, wl_p, bl_p)

    # Slice the real nodes / classes off the lane-dense slab.
    return out_padded[:n, :c]


def build_normalized_adjacency(edge_index, num_nodes):
    """Dense D^{-1/2} (A + I) D^{-1/2} from a [2, E] edge_index (glue, plain JAX)."""
    src, dst = edge_index[0], edge_index[1]
    a = jnp.zeros((num_nodes, num_nodes), jnp.float32)
    a = a.at[src, dst].set(1.0)
    a = a.at[dst, src].set(1.0)                                   # undirected
    eye = jnp.eye(num_nodes, dtype=jnp.float32)
    a = a * (1.0 - eye) + eye     # self loops exactly once (matches gcn_norm)
    deg = jnp.sum(a, axis=1)
    d_inv_sqrt = jnp.where(deg > 0, 1.0 / jnp.sqrt(deg), 0.0)
    return a * d_inv_sqrt[:, None] * d_inv_sqrt[None, :]
    # TODO(synk): block-sparse A_hat path (PrefetchScalarGridSpec over nonzero
    # (tm x 128) column blocks of A) would skip ~99.9% of the aggregation
    # bytes/FLOPs at real Citeseer sparsity — the largest remaining win.


if __name__ == "__main__":
    # Small shapes consistent with the module (features -> hidden -> classes),
    # chosen so the row tiling is exercised (2 row tiles at tm=256).
    num_nodes = 512
    num_in_features = 384
    num_hidden = 100
    num_classes = 6
    num_edges = 2048

    key = jax.random.PRNGKey(0)
    k_x, k_e, k_w1, k_w2, k_wl, k_bl = jax.random.split(key, 6)

    x = jax.random.normal(k_x, (num_nodes, num_in_features), jnp.float32)
    edge_index = jax.random.randint(k_e, (2, num_edges), 0, num_nodes, jnp.int32)
    a_hat = build_normalized_adjacency(edge_index, num_nodes)

    def glorot(k, shape):
        fan_in, fan_out = shape
        s = jnp.sqrt(6.0 / (fan_in + fan_out))
        return jax.random.uniform(k, shape, jnp.float32, -s, s)

    w1 = glorot(k_w1, (num_in_features, num_hidden))
    b1 = jnp.zeros((num_hidden,), jnp.float32)          # GCNConv bias init
    w2 = glorot(k_w2, (num_hidden, num_hidden))
    b2 = jnp.zeros((num_hidden,), jnp.float32)
    # nn.Linear weight is (classes, hidden) in torch; pass transposed [hidden, classes]
    w_lin_t = glorot(k_wl, (num_hidden, num_classes))
    b_lin = jax.random.uniform(k_bl, (num_classes,), jnp.float32,
                               -1.0 / jnp.sqrt(num_hidden),
                               1.0 / jnp.sqrt(num_hidden))

    out = gcn_citeseer_forward(x, a_hat, w1, b1, w2, b2, w_lin_t, b_lin)
    out = jax.block_until_ready(out)

    # sanity: shape and that rows of log_softmax exponentiate-sum to 1
    assert out.shape == (num_nodes, num_classes)
    row_sums = jnp.exp(out).sum(axis=1)
    assert jnp.allclose(row_sums, 1.0, atol=1e-3)

    # pure-JAX f32 reference (kernel uses bf16 operands -> loose tolerance)
    h1 = jnp.maximum(a_hat @ (x @ w1) + b1[None, :], 0.0)
    h2 = jnp.maximum(a_hat @ (h1 @ w2) + b2[None, :], 0.0)
    ref = jax.nn.log_softmax(h2 @ w_lin_t + b_lin[None, :], axis=1)
    assert float(jnp.max(jnp.abs(out - ref))) < 0.15

    print("KERNEL_OK")
</pallas_src>

<mosaic_0001>
module attributes {stable_mosaic.version = 11 : i64} {
  func.func @_xw_kernel(%arg0: i32, %arg1: memref<256x384xbf16, #tpu.memory_space<vmem>>, %arg2: memref<384x128xbf16, #tpu.memory_space<vmem>>, %arg3: memref<256x128xbf16, #tpu.memory_space<vmem>>) attributes {dimension_semantics = [#tpu.dimension_semantics<parallel>], iteration_bounds = array<i64: 2>, scalar_prefetch = 0 : i64, scratch_operands = 0 : i64, tpu.core_type = #tpu.core_type<tc>, window_params = [{transform_indices = @transform_0, window_bounds = array<i64: 256, 384>}, {pipeline_mode = #tpu.pipeline_mode<synchronous>, transform_indices = @transform_1, window_bounds = array<i64: 384, 128>}, {transform_indices = @transform_2, window_bounds = array<i64: 256, 128>}]} {
    %c0 = arith.constant 0 : index
    %c0_0 = arith.constant 0 : index
    %0 = vector.load %arg1[%c0, %c0_0] : memref<256x384xbf16, #tpu.memory_space<vmem>>, vector<256x384xbf16>
    %c0_1 = arith.constant 0 : index
    %c0_2 = arith.constant 0 : index
    %1 = vector.load %arg2[%c0_1, %c0_2] : memref<384x128xbf16, #tpu.memory_space<vmem>>, vector<384x128xbf16>
    %cst = arith.constant dense<0.000000e+00> : vector<256x128xf32>
    %2 = tpu.matmul %0, %1, %cst {dimension_numbers = #tpu.dot_dimension_numbers<[1], [0], [0], [1], [0, 0, 1, 1], [], []>} : vector<256x384xbf16>, vector<384x128xbf16>, vector<256x128xf32> -> vector<256x128xf32>
    %3 = arith.truncf %2 : vector<256x128xf32> to vector<256x128xbf16>
    %c0_3 = arith.constant 0 : index
    %c0_4 = arith.constant 0 : index
    %4 = vector.load %arg3[%c0_3, %c0_4] : memref<256x128xbf16, #tpu.memory_space<vmem>>, vector<256x128xbf16>
    tpu.vector_store %arg3[%c0_3, %c0_4], %3 {strides = array<i32>} : memref<256x128xbf16, #tpu.memory_space<vmem>>, vector<256x128xbf16>,
    return
  }
  func.func @transform_0(%arg0: i32) -> (i32, i32) {
    %c0_i32 = arith.constant 0 : i32
    %c0_i32_0 = arith.constant 0 : i32
    return %arg0, %c0_i32 : i32, i32
  }
  func.func @transform_1(%arg0: i32) -> (i32, i32) {
    %c0_i32 = arith.constant 0 : i32
    %c0_i32_0 = arith.constant 0 : i32
    %c0_i32_1 = arith.constant 0 : i32
    return %c0_i32, %c0_i32_0 : i32, i32
  }
  func.func @transform_2(%arg0: i32) -> (i32, i32) {
    %c0_i32 = arith.constant 0 : i32
    %c0_i32_0 = arith.constant 0 : i32
    return %arg0, %c0_i32 : i32, i32
  }
}

</mosaic_0001>

<llo_original>
// kernel: tpu_custom_call.1
$region0: #{tpu_custom_call.1}
  #allocation0 [shape = 'u32[]', space=smem, size = 0x4, offset = 0x4, fixed_abs, tag = 'smem constant byte address 0x4 - core index']
  #allocation1 [shape = 'u32[72,128]{1,0:T(1,128)}', space=vmem, size = 0x9000, scoped, tag = 'internal scratch']
  %s0 = inlined_call_operand.hbm [shape: bf16[512,384], index: 0, kind: input, shape index: {}]
  %s1 = inlined_call_operand.hbm [shape: bf16[384,128], index: 1, kind: input, shape index: {}]
  %s2 = inlined_call_operand.hbm [shape: bf16[512,128], index: 2, kind: output, shape index: {}]
  %s3 = sld [smem:[#allocation0]]
  $region49: #{tpu_custom_call.1} parent=0
    _
  %s5 = ssub.s32 1, %s3
  %s6 = scalar_select 0, %s5, %s3
  $region1: #{tpu_custom_call.1} parent=0
    #allocation2 [shape = 'u8[393216]{0}', space=vmem, size = 0x60000, scoped, tag = 'input window, operand 0']
    #allocation3 [shape = 's32[2]{0}', space=sflag, size = 0x8, scoped, tag = 'scoped memory for tpu_custom_call.1']
    #allocation4 [shape = 's32[2]{0}', space=sflag, size = 0x8, scoped, tag = 'scoped memory for tpu_custom_call.1']
    #allocation5 [shape = 'u8[98304]{0}', space=vmem, size = 0x18000, scoped, tag = 'input window, operand 1, single buffered']
    #allocation6 [shape = 's32[1]{0}', space=sflag, size = 0x4, scoped, tag = 'scoped memory for tpu_custom_call.1']
    #allocation7 [shape = 'u8[131072]{0}', space=vmem, size = 0x20000, scoped, tag = 'output window, operand 0']
    %7 = vsyncpa [#allocation3], 0
    %s8 = scalar_lea.sflag [#allocation3], 1
    %9 = vsyncpa %s8, 0
    %10 = vsyncpa [#allocation6], 0
    %11 = vsyncpa [#allocation4], 0
    %s12 = scalar_lea.sflag [#allocation4], 1
    %13 = vsyncpa %s12, 0
    loop: start=0, step=1, limit=4
    $region2: #{tpu_custom_call.1} parent=1 // loop_pre_header
      _
    $region3: #{tpu_custom_call.1} parent=1 // loop_header
      %s15 = sphi 0, %s19
      %p16 = scmp.ge.s32.totalorder %s15, 4
      %s25 = sphi 0, %s27
      %s28 = sphi 0, %s25
      %s29 = sphi 0, %s28
      %s45 = sphi 0, %s29
      %s49 = sphi 0, %s49
      %s51 = sphi 0, %s49
      %s52 = sphi 0, %s51
      %s66 = sphi 0, %s52
      %s72 = sphi 0, %s74
      %s75 = sphi 0, %s72
      %s76 = sphi 0, %s75
      %s92 = sphi 0, %s76
    $region4: #{tpu_custom_call.1} parent=1 // loop_header_branch
      %18 = sbr.rel (%p16) target = $region8
    $region5: #{tpu_custom_call.1} parent=1 // loop_body
      %s20 = ssub.s32 %s15, 1
      %s21 = ssub.s32 %s15, 2
      %s22 = sadd.s32 %s15, 1
      %s23 = ssub.s32 %s15, %s22
      %p24 = scmp.eq.s32.totalorder %s23, 0
      %s26 = sadd.s32 %s25, 1
      %s27 = scalar_select %p24, %s25, %s26
      %p30 = pneg %p24
      %p31 = scmp.eq.s32.totalorder %s15, 1
      %p32 = por %p30, %p31
      %p33 = scmp.ne.s32.totalorder %s25, %s28
      %p34 = scmp.eq.s32.totalorder %s15, 0
      %p35 = por %p33, %p34
      %p36 = scmp.ne.s32.totalorder %s25, %s28
      %p37 = scmp.eq.s32.totalorder %s20, 1
      %p38 = por %p36, %p37
      %p39 = scmp.ne.s32.totalorder %s28, %s29
      %p40 = scmp.eq.s32.totalorder %s20, 0
      %p41 = por %p39, %p40
      %p42 = scmp.ne.s32.totalorder %s28, %s29
      %p43 = scmp.eq.s32.totalorder %s21, 1
      %p44 = por %p42, %p43
      %p46 = scmp.ne.s32.totalorder %s29, %s45
      %p47 = scmp.eq.s32.totalorder %s21, 0
      %p48 = por %p46, %p47
      %s50 = sadd.s32 %s49, 1
      %p53 = scmp.eq.s32.totalorder %s15, 1
      %p54 = scmp.ne.s32.totalorder %s49, %s51
      %p55 = scmp.eq.s32.totalorder %s15, 0
      %p56 = por %p54, %p55
      %p57 = scmp.ne.s32.totalorder %s49, %s51
      %p58 = scmp.eq.s32.totalorder %s20, 1
      %p59 = por %p57, %p58
      %p60 = scmp.ne.s32.totalorder %s51, %s52
      %p61 = scmp.eq.s32.totalorder %s20, 0
      %p62 = por %p60, %p61
      %p63 = scmp.ne.s32.totalorder %s51, %s52
      %p64 = scmp.eq.s32.totalorder %s21, 1
      %p65 = por %p63, %p64
      %p67 = scmp.ne.s32.totalorder %s52, %s66
      %p68 = scmp.eq.s32.totalorder %s21, 0
      %p69 = por %p67, %p68
      %s70 = ssub.s32 %s15, %s22
      %p71 = scmp.eq.s32.totalorder %s70, 0
      %s73 = sadd.s32 %s72, 1
      %s74 = scalar_select %p71, %s72, %s73
      %p77 = pneg %p71
      %p78 = scmp.eq.s32.totalorder %s15, 1
      %p79 = por %p77, %p78
      %p80 = scmp.ne.s32.totalorder %s72, %s75
      %p81 = scmp.eq.s32.totalorder %s15, 0
      %p82 = por %p80, %p81
      %p83 = scmp.ne.s32.totalorder %s72, %s75
      %p84 = scmp.eq.s32.totalorder %s20, 1
      %p85 = por %p83, %p84
      %p86 = scmp.ne.s32.totalorder %s75, %s76
      %p87 = scmp.eq.s32.totalorder %s20, 0
      %p88 = por %p86, %p87
      %p89 = scmp.ne.s32.totalorder %s75, %s76
      %p90 = scmp.eq.s32.totalorder %s21, 1
      %p91 = por %p89, %p90
      %p93 = scmp.ne.s32.totalorder %s76, %s92
      %p94 = scmp.eq.s32.totalorder %s21, 0
      %p95 = por %p93, %p94
      %p96 = scmp.le.s32.totalorder 1, %s15
      %p97 = scmp.lt.s32.totalorder %s15, 3
      %p98 = pnand %p96, %p97
      %p99 = pneg %p98
      // Predicated region
      $region9: #{tpu_custom_call.1} parent=5 // pred_check
        _
      $region10: #{tpu_custom_call.1} parent=5 // pred_check_branch
        %101 = sbr.rel (%p98) target = $region12
      $region11: #{tpu_custom_call.1} parent=5 // pred_region
        %s102 = ssub.s32 %s15, 1
        // Predicated region
        $region13: #{tpu_custom_call.1} parent=11 // pred_check
          %p103 = pneg %p62
        $region14: #{tpu_custom_call.1} parent=11 // pred_check_branch
          %105 = sbr.rel (%p103) target = $region16
        $region15: #{tpu_custom_call.1} parent=11 // pred_region
          %107 = vsyncadd [#allocation6], 0
          %s108 = sshll.u32 %s1, 4
          %s109 = int_to_ptr.hbm [resolvable:$true] %s108
          %s110 = sshll.u32 [#allocation5], 4
          %s111 = int_to_ptr.vmem [resolvable:$true] %s110
          %116 = dma.hbm_to_vmem [thread:$0]  %s109, 3072, %s111, [#allocation6], 64, 64, 4
        $region16: #{tpu_custom_call.1} parent=11 // pred_fallthru
          _
      $region12: #{tpu_custom_call.1} parent=5 // pred_fallthru
        _
      %p117 = scmp.lt.s32.totalorder %s15, 2
      // Predicated region
      $region17: #{tpu_custom_call.1} parent=5 // pred_check
        %p118 = pneg %p117
      $region18: #{tpu_custom_call.1} parent=5 // pred_check_branch
        %120 = sbr.rel (%p118) target = $region20
      $region19: #{tpu_custom_call.1} parent=5 // pred_region
        // Predicated region
        $region21: #{tpu_custom_call.1} parent=19 // pred_check
          %p121 = pneg %p35
        $region22: #{tpu_custom_call.1} parent=19 // pred_check_branch
          %123 = sbr.rel (%p121) target = $region24
        $region23: #{tpu_custom_call.1} parent=19 // pred_region
          %s124 = sand.u32 %s25, 1
          %s125 = scalar_lea.sflag [#allocation3], %s124
          %s126 = sand.u32 %s25, 1
          %s127 = smul.addr %s126, 384
          %s128 = scalar_lea.vmem [#allocation2], %s127
          %s129 = smul.u32 32, %s15
          %131 = vsyncadd %s125, 0
          %s132 = smul.addr %s129, 3
          %s133 = smul.addr %s132, 4
          %s134 = scalar_lea.hbm %s0, %s133
          %s135 = sshll.u32 %s134, 4
          %s136 = int_to_ptr.hbm [resolvable:$true] %s135
          %s137 = sshll.u32 %s128, 4
          %s138 = int_to_ptr.vmem [resolvable:$true] %s137
          %143 = dma.hbm_to_vmem [thread:$0]  %s136, 6144, %s138, %s125, 192, 192, 12
        $region24: #{tpu_custom_call.1} parent=19 // pred_fallthru
          _
      $region20: #{tpu_custom_call.1} parent=5 // pred_fallthru
        _
      %p144 = scmp.le.s32.totalorder 1, %s15
      %p145 = scmp.lt.s32.totalorder %s15, 3
      %p146 = pnand %p144, %p145
      %p147 = pneg %p146
      // Predicated region
      $region25: #{tpu_custom_call.1} parent=5 // pred_check
        _
      $region26: #{tpu_custom_call.1} parent=5 // pred_check_branch
        %149 = sbr.rel (%p146) target = $region28
      $region27: #{tpu_custom_call.1} parent=5 // pred_region
        %s150 = ssub.s32 %s15, 1
        %s151 = sand.u32 %s28, 1
        %s152 = scalar_lea.sflag [#allocation3], %s151
        %s153 = sand.u32 %s28, 1
        %s154 = smul.addr %s153, 384
        %s155 = scalar_lea.vmem [#allocation2], %s154
        // Predicated region
        $region29: #{tpu_custom_call.1} parent=27 // pred_check
          %p156 = pneg %p41
        $region30: #{tpu_custom_call.1} parent=27 // pred_check_branch
          %158 = sbr.rel (%p156) target = $region32
        $region31: #{tpu_custom_call.1} parent=27 // pred_region
          %160 = dma.done %s152, 6144
        $region32: #{tpu_custom_call.1} parent=27 // pred_fallthru
          _
        // Predicated region
        $region33: #{tpu_custom_call.1} parent=27 // pred_check
          %p161 = pneg %p62
        $region34: #{tpu_custom_call.1} parent=27 // pred_check_branch
          %163 = sbr.rel (%p161) target = $region36
        $region35: #{tpu_custom_call.1} parent=27 // pred_region
          %165 = dma.done [#allocation6], 3072
        $region36: #{tpu_custom_call.1} parent=27 // pred_fallthru
          _
        %s166 = sand.u32 %s28, 1
        %s167 = scalar_lea.sflag [#allocation3], %s166
        %s168 = sand.u32 %s28, 1
        %s169 = smul.addr %s168, 384
        %s170 = scalar_lea.vmem [#allocation2], %s169
        %p171 = pneg %p41
        %p172 = pneg %p38
        %p173 = pneg %p62
        %p174 = pneg %p59
        %p175 = pneg %p88
        %p176 = pneg %p85
        %s177 = sand.u32 %s75, 1
        %s178 = scalar_lea.sflag [#allocation4], %s177
        %s179 = sand.u32 %s75, 1
        %s180 = smul.addr %s179, 128
        %s181 = scalar_lea.vmem [#allocation7], %s180
        %s182 = smul.u32 32, %s20
        %s183 = smul.u32 32, %s20
        %v184 = vld [vmem:[%s155] sm:$0xff]
        %v185 = vld [vmem:[%s155 + $0x8] sm:$0xf]
        %v186 = vld [vmem:[%s155 + $0xc] sm:$0xff]
        %v187 = vld [vmem:[%s155 + $0x14] sm:$0xf]
        %v188 = vld [vmem:[%s155 + $0x18] sm:$0xff]
        %v189 = vld [vmem:[%s155 + $0x20] sm:$0xf]
        %v190 = vld [vmem:[%s155 + $0x24] sm:$0xff]
        %v191 = vld [vmem:[%s155 + $0x2c] sm:$0xf]
        %v192 = vld [vmem:[%s155 + $0x30] sm:$0xff]
        %v193 = vld [vmem:[%s155 + $0x38] sm:$0xf]
        %v194 = vld [vmem:[%s155 + $0x3c] sm:$0xff]
        %v195 = vld [vmem:[%s155 + $0x44] sm:$0xf]
        %v196 = vld [vmem:[%s155 + $0x48] sm:$0xff]
        %v197 = vld [vmem:[%s155 + $0x50] sm:$0xf]
        %v198 = vld [vmem:[%s155 + $0x54] sm:$0xff]
        %v199 = vld [vmem:[%s155 + $0x5c] sm:$0xf]
        %v200 = vld [vmem:[%s155 + $0x60] sm:$0xff]
        %v201 = vld [vmem:[%s155 + $0x68] sm:$0xf]
        %v202 = vld [vmem:[%s155 + $0x6c] sm:$0xff]
        %v203 = vld [vmem:[%s155 + $0x74] sm:$0xf]
        %v204 = vld [vmem:[%s155 + $0x78] sm:$0xff]
        %v205 = vld [vmem:[%s155 + $0x80] sm:$0xf]
        %v206 = vld [vmem:[%s155 + $0x84] sm:$0xff]
        %v207 = vld [vmem:[%s155 + $0x8c] sm:$0xf]
        %v208 = vld [vmem:[%s155 + $0x90] sm:$0xff]
        %v209 = vld [vmem:[%s155 + $0x98] sm:$0xf]
        %v210 = vld [vmem:[%s155 + $0x9c] sm:$0xff]
        %v211 = vld [vmem:[%s155 + $0xa4] sm:$0xf]
        %v212 = vld [vmem:[%s155 + $0xa8] sm:$0xff]
        %v213 = vld [vmem:[%s155 + $0xb0] sm:$0xf]
        %v214 = vld [vmem:[%s155 + $0xb4] sm:$0xff]
        %v215 = vld [vmem:[%s155 + $0xbc] sm:$0xf]
        %v216 = vld [vmem:[%s155 + $0xc0] sm:$0xff]
        %v217 = vld [vmem:[%s155 + $0xc8] sm:$0xf]
        %v218 = vld [vmem:[%s155 + $0xcc] sm:$0xff]
        %v219 = vld [vmem:[%s155 + $0xd4] sm:$0xf]
        %v220 = vld [vmem:[%s155 + $0xd8] sm:$0xff]
        %v221 = vld [vmem:[%s155 + $0xe0] sm:$0xf]
        %v222 = vld [vmem:[%s155 + $0xe4] sm:$0xff]
        %v223 = vld [vmem:[%s155 + $0xec] sm:$0xf]
        %v224 = vld [vmem:[%s155 + $0xf0] sm:$0xff]
        %v225 = vld [vmem:[%s155 + $0xf8] sm:$0xf]
        %v226 = vld [vmem:[%s155 + $0xfc] sm:$0xff]
        %v227 = vld [vmem:[%s155 + $0x104] sm:$0xf]
        %v228 = vld [vmem:[%s155 + $0x108] sm:$0xff]
        %v229 = vld [vmem:[%s155 + $0x110] sm:$0xf]
        %v230 = vld [vmem:[%s155 + $0x114] sm:$0xff]
        %v231 = vld [vmem:[%s155 + $0x11c] sm:$0xf]
        %v232 = vld [vmem:[%s155 + $0x120] sm:$0xff]
        %v233 = vld [vmem:[%s155 + $0x128] sm:$0xf]
        %v234 = vld [vmem:[%s155 + $0x12c] sm:$0xff]
        %v235 = vld [vmem:[%s155 + $0x134] sm:$0xf]
        %v236 = vld [vmem:[%s155 + $0x138] sm:$0xff]
        %v237 = vld [vmem:[%s155 + $0x140] sm:$0xf]
        %v238 = vld [vmem:[%s155 + $0x144] sm:$0xff]
        %v239 = vld [vmem:[%s155 + $0x14c] sm:$0xf]
        %v240 = vld [vmem:[%s155 + $0x150] sm:$0xff]
        %v241 = vld [vmem:[%s155 + $0x158] sm:$0xf]
        %v242 = vld [vmem:[%s155 + $0x15c] sm:$0xff]
        %v243 = vld [vmem:[%s155 + $0x164] sm:$0xf]
        %v244 = vld [vmem:[%s155 + $0x168] sm:$0xff]
        %v245 = vld [vmem:[%s155 + $0x170] sm:$0xf]
        %v246 = vld [vmem:[%s155 + $0x174] sm:$0xff]
        %v247 = vld [vmem:[%s155 + $0x17c] sm:$0xf]
        %v248 = vld [vmem:[#allocation5] sm:$0xf]
        %v249 = vld [vmem:[#allocation5 + $0x4] sm:$0xf]
        %v250 = vld [vmem:[#allocation5 + $0x8] sm:$0xf]
        %v251 = vld [vmem:[#allocation5 + $0xc] sm:$0xf]
        %v252 = vld [vmem:[#allocation5 + $0x10] sm:$0xf]
        %v253 = vld [vmem:[#allocation5 + $0x14] sm:$0xf]
        %v254 = vld [vmem:[#allocation5 + $0x18] sm:$0xf]
        %v255 = vld [vmem:[#allocation5 + $0x1c] sm:$0xf]
        %v256 = vld [vmem:[#allocation5 + $0x20] sm:$0xf]
        %v257 = vld [vmem:[#allocation5 + $0x24] sm:$0xf]
        %v258 = vld [vmem:[#allocation5 + $0x28] sm:$0xf]
        %v259 = vld [vmem:[#allocation5 + $0x2c] sm:$0xf]
        %v260 = vld [vmem:[#allocation5 + $0x30] sm:$0xf]
        %v261 = vld [vmem:[#allocation5 + $0x34] sm:$0xf]
        %v262 = vld [vmem:[#allocation5 + $0x38] sm:$0xf]
        %v263 = vld [vmem:[#allocation5 + $0x3c] sm:$0xf]
        %v264 = vld [vmem:[#allocation5 + $0x40] sm:$0xf]
        %v265 = vld [vmem:[#allocation5 + $0x44] sm:$0xf]
        %v266 = vld [vmem:[#allocation5 + $0x48] sm:$0xf]
        %v267 = vld [vmem:[#allocation5 + $0x4c] sm:$0xf]
        %v268 = vld [vmem:[#allocation5 + $0x50] sm:$0xf]
        %v269 = vld [vmem:[#allocation5 + $0x54] sm:$0xf]
        %v270 = vld [vmem:[#allocation5 + $0x58] sm:$0xf]
        %v271 = vld [vmem:[#allocation5 + $0x5c] sm:$0xf]
        %v272 = vld [vmem:[#allocation5 + $0x60] sm:$0xf]
        %v273 = vld [vmem:[#allocation5 + $0x64] sm:$0xf]
        %v274 = vld [vmem:[#allocation5 + $0x68] sm:$0xf]
        %v275 = vld [vmem:[#allocation5 + $0x6c] sm:$0xf]
        %v276 = vld [vmem:[#allocation5 + $0x70] sm:$0xf]
        %v277 = vld [vmem:[#allocation5 + $0x74] sm:$0xf]
        %v278 = vld [vmem:[#allocation5 + $0x78] sm:$0xf]
        %v279 = vld [vmem:[#allocation5 + $0x7c] sm:$0xf]
        %v280 = vld [vmem:[#allocation5 + $0x80] sm:$0xf]
        %v281 = vld [vmem:[#allocation5 + $0x84] sm:$0xf]
        %v282 = vld [vmem:[#allocation5 + $0x88] sm:$0xf]
        %v283 = vld [vmem:[#allocation5 + $0x8c] sm:$0xf]
        %v284 = vld [vmem:[#allocation5 + $0x90] sm:$0xf]
        %v285 = vld [vmem:[#allocation5 + $0x94] sm:$0xf]
        %v286 = vld [vmem:[#allocation5 + $0x98] sm:$0xf]
        %v287 = vld [vmem:[#allocation5 + $0x9c] sm:$0xf]
        %v288 = vld [vmem:[#allocation5 + $0xa0] sm:$0xf]
        %v289 = vld [vmem:[#allocation5 + $0xa4] sm:$0xf]
        %v290 = vld [vmem:[#allocation5 + $0xa8] sm:$0xf]
        %v291 = vld [vmem:[#allocation5 + $0xac] sm:$0xf]
        %v292 = vld [vmem:[#allocation5 + $0xb0] sm:$0xf]
        %v293 = vld [vmem:[#allocation5 + $0xb4] sm:$0xf]
        %v294 = vld [vmem:[#allocation5 + $0xb8] sm:$0xf]
        %v295 = vld [vmem:[#allocation5 + $0xbc] sm:$0xf]
        %v360 = vunpack.c.l.b16 %v184
        %v361 = vunpack.c.h.b16 %v184
        %v362 = vunpack.c.l.b16 %v185
        %v363 = vunpack.c.l.b16 %v186
        %v364 = vunpack.c.h.b16 %v186
        %v365 = vunpack.c.l.b16 %v187
        %v366 = vunpack.c.l.b16 %v188
        %v367 = vunpack.c.h.b16 %v188
        %v368 = vunpack.c.l.b16 %v189
        %v369 = vunpack.c.l.b16 %v190
        %v370 = vunpack.c.h.b16 %v190
        %v371 = vunpack.c.l.b16 %v191
        %v372 = vunpack.c.l.b16 %v192
        %v373 = vunpack.c.h.b16 %v192
        %v374 = vunpack.c.l.b16 %v193
        %v375 = vunpack.c.l.b16 %v194
        %v376 = vunpack.c.h.b16 %v194
        %v377 = vunpack.c.l.b16 %v195
        %v378 = vunpack.c.l.b16 %v196
        %v379 = vunpack.c.h.b16 %v196
        %v380 = vunpack.c.l.b16 %v197
        %v381 = vunpack.c.l.b16 %v198
        %v382 = vunpack.c.h.b16 %v198
        %v383 = vunpack.c.l.b16 %v199
        %v384 = vunpack.c.l.b16 %v200
        %v385 = vunpack.c.h.b16 %v200
        %v386 = vunpack.c.l.b16 %v201
        %v387 = vunpack.c.l.b16 %v202
        %v388 = vunpack.c.h.b16 %v202
        %v389 = vunpack.c.l.b16 %v203
        %v390 = vunpack.c.l.b16 %v204
        %v391 = vunpack.c.h.b16 %v204
        %v392 = vunpack.c.l.b16 %v205
        %v393 = vunpack.c.l.b16 %v206
        %v394 = vunpack.c.h.b16 %v206
        %v395 = vunpack.c.l.b16 %v207
        %v396 = vunpack.c.l.b16 %v208
        %v397 = vunpack.c.h.b16 %v208
        %v398 = vunpack.c.l.b16 %v209
        %v399 = vunpack.c.l.b16 %v210
        %v400 = vunpack.c.h.b16 %v210
        %v401 = vunpack.c.l.b16 %v211
        %v402 = vunpack.c.l.b16 %v212
        %v403 = vunpack.c.h.b16 %v212
        %v404 = vunpack.c.l.b16 %v213
        %v405 = vunpack.c.l.b16 %v214
        %v406 = vunpack.c.h.b16 %v214
        %v407 = vunpack.c.l.b16 %v215
        %v408 = vunpack.c.l.b16 %v216
        %v409 = vunpack.c.h.b16 %v216
        %v410 = vunpack.c.l.b16 %v217
        %v411 = vunpack.c.l.b16 %v218
        %v412 = vunpack.c.h.b16 %v218
        %v413 = vunpack.c.l.b16 %v219
        %v414 = vunpack.c.l.b16 %v220
        %v415 = vunpack.c.h.b16 %v220
        %v416 = vunpack.c.l.b16 %v221
        %v417 = vunpack.c.l.b16 %v222
        %v418 = vunpack.c.h.b16 %v222
        %v419 = vunpack.c.l.b16 %v223
        %v420 = vunpack.c.l.b16 %v224
        %v421 = vunpack.c.h.b16 %v224
        %v422 = vunpack.c.l.b16 %v225
        %v423 = vunpack.c.l.b16 %v226
        %v424 = vunpack.c.h.b16 %v226
        %v425 = vunpack.c.l.b16 %v227
        %v426 = vunpack.c.l.b16 %v228
        %v427 = vunpack.c.h.b16 %v228
        %v428 = vunpack.c.l.b16 %v229
        %v429 = vunpack.c.l.b16 %v230
        %v430 = vunpack.c.h.b16 %v230
        %v431 = vunpack.c.l.b16 %v231
        %v432 = vunpack.c.l.b16 %v232
        %v433 = vunpack.c.h.b16 %v232
        %v434 = vunpack.c.l.b16 %v233
        %v435 = vunpack.c.l.b16 %v234
        %v436 = vunpack.c.h.b16 %v234
        %v437 = vunpack.c.l.b16 %v235
        %v438 = vunpack.c.l.b16 %v236
        %v439 = vunpack.c.h.b16 %v236
        %v440 = vunpack.c.l.b16 %v237
        %v441 = vunpack.c.l.b16 %v238
        %v442 = vunpack.c.h.b16 %v238
        %v443 = vunpack.c.l.b16 %v239
        %v444 = vunpack.c.l.b16 %v240
        %v445 = vunpack.c.h.b16 %v240
        %v446 = vunpack.c.l.b16 %v241
        %v447 = vunpack.c.l.b16 %v242
        %v448 = vunpack.c.h.b16 %v242
        %v449 = vunpack.c.l.b16 %v243
        %v450 = vunpack.c.l.b16 %v244
        %v451 = vunpack.c.h.b16 %v244
        %v452 = vunpack.c.l.b16 %v245
        %v453 = vunpack.c.l.b16 %v246
        %v454 = vunpack.c.h.b16 %v246
        %v455 = vunpack.c.l.b16 %v247
        %v456 = vpack.c.b16 %v363, %v360
        %v457 = vpack.c.b16 %v364, %v361
        %v458 = vpack.c.b16 %v365, %v362
        %v459 = vpack.c.b16 %v369, %v366
        %v460 = vpack.c.b16 %v370, %v367
        %v461 = vpack.c.b16 %v371, %v368
        %v462 = vpack.c.b16 %v375, %v372
        %v463 = vpack.c.b16 %v376, %v373
        %v464 = vpack.c.b16 %v377, %v374
        %v465 = vpack.c.b16 %v381, %v378
        %v466 = vpack.c.b16 %v382, %v379
        %v467 = vpack.c.b16 %v383, %v380
        %v468 = vpack.c.b16 %v387, %v384
        %v469 = vpack.c.b16 %v388, %v385
        %v470 = vpack.c.b16 %v389, %v386
        %v471 = vpack.c.b16 %v393, %v390
        %v472 = vpack.c.b16 %v394, %v391
        %v473 = vpack.c.b16 %v395, %v392
        %v474 = vpack.c.b16 %v399, %v396
        %v475 = vpack.c.b16 %v400, %v397
        %v476 = vpack.c.b16 %v401, %v398
        %v477 = vpack.c.b16 %v405, %v402
        %v478 = vpack.c.b16 %v406, %v403
        %v479 = vpack.c.b16 %v407, %v404
        %v480 = vpack.c.b16 %v411, %v408
        %v481 = vpack.c.b16 %v412, %v409
        %v482 = vpack.c.b16 %v413, %v410
        %v483 = vpack.c.b16 %v417, %v414
        %v484 = vpack.c.b16 %v418, %v415
        %v485 = vpack.c.b16 %v419, %v416
        %v486 = vpack.c.b16 %v423, %v420
        %v487 = vpack.c.b16 %v424, %v421
        %v488 = vpack.c.b16 %v425, %v422
        %v489 = vpack.c.b16 %v429, %v426
        %v490 = vpack.c.b16 %v430, %v427
        %v491 = vpack.c.b16 %v431, %v428
        %v492 = vpack.c.b16 %v435, %v432
        %v493 = vpack.c.b16 %v436, %v433
        %v494 = vpack.c.b16 %v437, %v434
        %v495 = vpack.c.b16 %v441, %v438
        %v496 = vpack.c.b16 %v442, %v439
        %v497 = vpack.c.b16 %v443, %v440
        %v498 = vpack.c.b16 %v447, %v444
        %v499 = vpack.c.b16 %v448, %v445
        %v500 = vpack.c.b16 %v449, %v446
        %v501 = vpack.c.b16 %v453, %v450
        %v502 = vpack.c.b16 %v454, %v451
        %v503 = vpack.c.b16 %v455, %v452
        %v600 = vunpack.c.l.b16 %v248
        %v601 = vunpack.c.l.b16 %v249
        %v602 = vunpack.c.l.b16 %v250
        %v603 = vunpack.c.l.b16 %v251
        %v604 = vunpack.c.l.b16 %v252
        %v605 = vunpack.c.l.b16 %v253
        %v606 = vunpack.c.l.b16 %v254
        %v607 = vunpack.c.l.b16 %v255
        %v608 = vunpack.c.l.b16 %v256
        %v609 = vunpack.c.l.b16 %v257
        %v610 = vunpack.c.l.b16 %v258
        %v611 = vunpack.c.l.b16 %v259
        %v612 = vunpack.c.l.b16 %v260
        %v613 = vunpack.c.l.b16 %v261
        %v614 = vunpack.c.l.b16 %v262
        %v615 = vunpack.c.l.b16 %v263
        %v616 = vunpack.c.l.b16 %v264
        %v617 = vunpack.c.l.b16 %v265
        %v618 = vunpack.c.l.b16 %v266
        %v619 = vunpack.c.l.b16 %v267
        %v620 = vunpack.c.l.b16 %v268
        %v621 = vunpack.c.l.b16 %v269
        %v622 = vunpack.c.l.b16 %v270
        %v623 = vunpack.c.l.b16 %v271
        %v624 = vunpack.c.l.b16 %v272
        %v625 = vunpack.c.l.b16 %v273
        %v626 = vunpack.c.l.b16 %v274
        %v627 = vunpack.c.l.b16 %v275
        %v628 = vunpack.c.l.b16 %v276
        %v629 = vunpack.c.l.b16 %v277
        %v630 = vunpack.c.l.b16 %v278
        %v631 = vunpack.c.l.b16 %v279
        %v632 = vunpack.c.l.b16 %v280
        %v633 = vunpack.c.l.b16 %v281
        %v634 = vunpack.c.l.b16 %v282
        %v635 = vunpack.c.l.b16 %v283
        %v636 = vunpack.c.l.b16 %v284
        %v637 = vunpack.c.l.b16 %v285
        %v638 = vunpack.c.l.b16 %v286
        %v639 = vunpack.c.l.b16 %v287
        %v640 = vunpack.c.l.b16 %v288
        %v641 = vunpack.c.l.b16 %v289
        %v642 = vunpack.c.l.b16 %v290
        %v643 = vunpack.c.l.b16 %v291
        %v644 = vunpack.c.l.b16 %v292
        %v645 = vunpack.c.l.b16 %v293
        %v646 = vunpack.c.l.b16 %v294
        %v647 = vunpack.c.l.b16 %v295
        %v648 = vpack.c.b16 %v601, %v600
        %v649 = vpack.c.b16 %v603, %v602
        %v650 = vpack.c.b16 %v605, %v604
        %v651 = vpack.c.b16 %v607, %v606
        %v652 = vpack.c.b16 %v609, %v608
        %v653 = vpack.c.b16 %v611, %v610
        %v654 = vpack.c.b16 %v613, %v612
        %v655 = vpack.c.b16 %v615, %v614
        %v656 = vpack.c.b16 %v617, %v616
        %v657 = vpack.c.b16 %v619, %v618
        %v658 = vpack.c.b16 %v621, %v620
        %v659 = vpack.c.b16 %v623, %v622
        %v660 = vpack.c.b16 %v625, %v624
        %v661 = vpack.c.b16 %v627, %v626
        %v662 = vpack.c.b16 %v629, %v628
        %v663 = vpack.c.b16 %v631, %v630
        %v664 = vpack.c.b16 %v633, %v632
        %v665 = vpack.c.b16 %v635, %v634
        %v666 = vpack.c.b16 %v637, %v636
        %v667 = vpack.c.b16 %v639, %v638
        %v668 = vpack.c.b16 %v641, %v640
        %v669 = vpack.c.b16 %v643, %v642
        %v670 = vpack.c.b16 %v645, %v644
        %v671 = vpack.c.b16 %v647, %v646
        %696 = vmatpush.bf16.msra.mxu0 %v655
        %697 = vmatpush.bf16.msra.mxu0 %v654
        %698 = vmatpush.bf16.msra.mxu0 %v653
        %699 = vmatpush.bf16.msra.mxu0 %v652
        %700 = vmatpush.bf16.msra.mxu0 %v651
        %701 = vmatpush.bf16.msra.mxu0 %v650
        %702 = vmatpush.bf16.msra.mxu0 %v649
        %703 = vmatpush.bf16.msra.mxu0 %v648
        %704 = vmatmul.bf16.gmra.mxu0 %v456
        %v705 = vpop.f32.mrf.mxu0
        %v706 = vadd.f32 0.0, %v705
        %v707 = vpop.f32.mrf.mxu0
        %v708 = vadd.f32 0.0, %v707
        %709 = vmatmul.bf16.gmra.mxu0 %v459
        %v710 = vpop.f32.mrf.mxu0
        %v711 = vadd.f32 0.0, %v710
        %v712 = vpop.f32.mrf.mxu0
        %v713 = vadd.f32 0.0, %v712
        %714 = vmatmul.bf16.gmra.mxu0 %v462
        %v715 = vpop.f32.mrf.mxu0
        %v716 = vadd.f32 0.0, %v715
        %v717 = vpop.f32.mrf.mxu0
        %v718 = vadd.f32 0.0, %v717
        %719 = vmatmul.bf16.gmra.mxu0 %v465
        %v720 = vpop.f32.mrf.mxu0
        %v721 = vadd.f32 0.0, %v720
        %v722 = vpop.f32.mrf.mxu0
        %v723 = vadd.f32 0.0, %v722
        %724 = vmatmul.bf16.gmra.mxu0 %v468
        %v725 = vpop.f32.mrf.mxu0
        %v726 = vadd.f32 0.0, %v725
        %v727 = vpop.f32.mrf.mxu0
        %v728 = vadd.f32 0.0, %v727
        %729 = vmatmul.bf16.gmra.mxu0 %v471
        %v730 = vpop.f32.mrf.mxu0
        %v731 = vadd.f32 0.0, %v730
        %v732 = vpop.f32.mrf.mxu0
        %v733 = vadd.f32 0.0, %v732
        %734 = vmatmul.bf16.gmra.mxu0 %v474
        %v735 = vpop.f32.mrf.mxu0
        %v736 = vadd.f32 0.0, %v735
        %v737 = vpop.f32.mrf.mxu0
        %v738 = vadd.f32 0.0, %v737
        %739 = vmatmul.bf16.gmra.mxu0 %v477
        %v740 = vpop.f32.mrf.mxu0
        %v741 = vadd.f32 0.0, %v740
        %v742 = vpop.f32.mrf.mxu0
        %v743 = vadd.f32 0.0, %v742
        %744 = vmatmul.bf16.gmra.mxu0 %v480
        %v745 = vpop.f32.mrf.mxu0
        %v746 = vadd.f32 0.0, %v745
        %v747 = vpop.f32.mrf.mxu0
        %v748 = vadd.f32 0.0, %v747
        %749 = vmatmul.bf16.gmra.mxu0 %v483
        %v750 = vpop.f32.mrf.mxu0
        %v751 = vadd.f32 0.0, %v750
        %v752 = vpop.f32.mrf.mxu0
        %v753 = vadd.f32 0.0, %v752
        %754 = vmatmul.bf16.gmra.mxu0 %v486
        %v755 = vpop.f32.mrf.mxu0
        %v756 = vadd.f32 0.0, %v755
        %v757 = vpop.f32.mrf.mxu0
        %v758 = vadd.f32 0.0, %v757
        %759 = vmatmul.bf16.gmra.mxu0 %v489
        %v760 = vpop.f32.mrf.mxu0
        %v761 = vadd.f32 0.0, %v760
        %v762 = vpop.f32.mrf.mxu0
        %v763 = vadd.f32 0.0, %v762
        %764 = vmatmul.bf16.gmra.mxu0 %v492
        %v765 = vpop.f32.mrf.mxu0
        %v766 = vadd.f32 0.0, %v765
        %v767 = vpop.f32.mrf.mxu0
        %v768 = vadd.f32 0.0, %v767
        %769 = vmatmul.bf16.gmra.mxu0 %v495
        %v770 = vpop.f32.mrf.mxu0
        %v771 = vadd.f32 0.0, %v770
        %v772 = vpop.f32.mrf.mxu0
        %v773 = vadd.f32 0.0, %v772
        %774 = vmatmul.bf16.gmra.mxu0 %v498
        %v775 = vpop.f32.mrf.mxu0
        %v776 = vadd.f32 0.0, %v775
        %v777 = vpop.f32.mrf.mxu0
        %v778 = vadd.f32 0.0, %v777
        %779 = vmatmul.bf16.gmra.mxu0 %v501
        %v780 = vpop.f32.mrf.mxu0
        %v781 = vadd.f32 0.0, %v780
        %v782 = vpop.f32.mrf.mxu0
        %v783 = vadd.f32 0.0, %v782
        %784 = vdwg.mxu0
        %785 = vmatpush.bf16.msra.mxu0 %v663
        %786 = vmatpush.bf16.msra.mxu0 %v662
        %787 = vmatpush.bf16.msra.mxu0 %v661
        %788 = vmatpush.bf16.msra.mxu0 %v660
        %789 = vmatpush.bf16.msra.mxu0 %v659
        %790 = vmatpush.bf16.msra.mxu0 %v658
        %791 = vmatpush.bf16.msra.mxu0 %v657
        %792 = vmatpush.bf16.msra.mxu0 %v656
        %793 = vmatmul.bf16.gmra.mxu0 %v457
        %v794 = vpop.f32.mrf.mxu0
        %v795 = vadd.f32 %v706, %v794
        %v796 = vpop.f32.mrf.mxu0
        %v797 = vadd.f32 %v708, %v796
        %798 = vmatmul.bf16.gmra.mxu0 %v460
        %v799 = vpop.f32.mrf.mxu0
        %v800 = vadd.f32 %v711, %v799
        %v801 = vpop.f32.mrf.mxu0
        %v802 = vadd.f32 %v713, %v801
        %803 = vmatmul.bf16.gmra.mxu0 %v463
        %v804 = vpop.f32.mrf.mxu0
        %v805 = vadd.f32 %v716, %v804
        %v806 = vpop.f32.mrf.mxu0
        %v807 = vadd.f32 %v718, %v806
        %808 = vmatmul.bf16.gmra.mxu0 %v466
        %v809 = vpop.f32.mrf.mxu0
        %v810 = vadd.f32 %v721, %v809
        %v811 = vpop.f32.mrf.mxu0
        %v812 = vadd.f32 %v723, %v811
        %813 = vmatmul.bf16.gmra.mxu0 %v469
        %v814 = vpop.f32.mrf.mxu0
        %v815 = vadd.f32 %v726, %v814
        %v816 = vpop.f32.mrf.mxu0
        %v817 = vadd.f32 %v728, %v816
        %818 = vmatmul.bf16.gmra.mxu0 %v472
        %v819 = vpop.f32.mrf.mxu0
        %v820 = vadd.f32 %v731, %v819
        %v821 = vpop.f32.mrf.mxu0
        %v822 = vadd.f32 %v733, %v821
        %823 = vmatmul.bf16.gmra.mxu0 %v475
        %v824 = vpop.f32.mrf.mxu0
        %v825 = vadd.f32 %v736, %v824
        %v826 = vpop.f32.mrf.mxu0
        %v827 = vadd.f32 %v738, %v826
        %828 = vmatmul.bf16.gmra.mxu0 %v478
        %v829 = vpop.f32.mrf.mxu0
        %v830 = vadd.f32 %v741, %v829
        %v831 = vpop.f32.mrf.mxu0
        %v832 = vadd.f32 %v743, %v831
        %833 = vmatmul.bf16.gmra.mxu0 %v481
        %v834 = vpop.f32.mrf.mxu0
        %v835 = vadd.f32 %v746, %v834
        %v836 = vpop.f32.mrf.mxu0
        %v837 = vadd.f32 %v748, %v836
        %838 = vmatmul.bf16.gmra.mxu0 %v484
        %v839 = vpop.f32.mrf.mxu0
        %v840 = vadd.f32 %v751, %v839
        %v841 = vpop.f32.mrf.mxu0
        %v842 = vadd.f32 %v753, %v841
        %843 = vmatmul.bf16.gmra.mxu0 %v487
        %v844 = vpop.f32.mrf.mxu0
        %v845 = vadd.f32 %v756, %v844
        %v846 = vpop.f32.mrf.mxu0
        %v847 = vadd.f32 %v758, %v846
        %848 = vmatmul.bf16.gmra.mxu0 %v490
        %v849 = vpop.f32.mrf.mxu0
        %v850 = vadd.f32 %v761, %v849
        %v851 = vpop.f32.mrf.mxu0
        %v852 = vadd.f32 %v763, %v851
        %853 = vmatmul.bf16.gmra.mxu0 %v493
        %v854 = vpop.f32.mrf.mxu0
        %v855 = vadd.f32 %v766, %v854
        %v856 = vpop.f32.mrf.mxu0
        %v857 = vadd.f32 %v768, %v856
        %858 = vmatmul.bf16.gmra.mxu0 %v496
        %v859 = vpop.f32.mrf.mxu0
        %v860 = vadd.f32 %v771, %v859
        %v861 = vpop.f32.mrf.mxu0
        %v862 = vadd.f32 %v773, %v861
        %863 = vmatmul.bf16.gmra.mxu0 %v499
        %v864 = vpop.f32.mrf.mxu0
        %v865 = vadd.f32 %v776, %v864
        %v866 = vpop.f32.mrf.mxu0
        %v867 = vadd.f32 %v778, %v866
        %868 = vmatmul.bf16.gmra.mxu0 %v502
        %v869 = vpop.f32.mrf.mxu0
        %v870 = vadd.f32 %v781, %v869
        %v871 = vpop.f32.mrf.mxu0
        %v872 = vadd.f32 %v783, %v871
        %873 = vdwg.mxu0
        %874 = vmatpush.bf16.msra.mxu0 %v671
        %875 = vmatpush.bf16.msra.mxu0 %v670
        %876 = vmatpush.bf16.msra.mxu0 %v669
        %877 = vmatpush.bf16.msra.mxu0 %v668
        %878 = vmatpush.bf16.msra.mxu0 %v667
        %879 = vmatpush.bf16.msra.mxu0 %v666
        %880 = vmatpush.bf16.msra.mxu0 %v665
        %881 = vmatpush.bf16.msra.mxu0 %v664
        %882 = vmatmul.bf16.gmra.mxu0 %v458
        %v883 = vpop.f32.mrf.mxu0
        %v884 = vadd.f32 %v795, %v883
        %v885 = vpop.f32.mrf.mxu0
        %v886 = vadd.f32 %v797, %v885
        %887 = vmatmul.bf16.gmra.mxu0 %v461
        %v888 = vpop.f32.mrf.mxu0
        %v889 = vadd.f32 %v800, %v888
        %v890 = vpop.f32.mrf.mxu0
        %v891 = vadd.f32 %v802, %v890
        %892 = vmatmul.bf16.gmra.mxu0 %v464
        %v893 = vpop.f32.mrf.mxu0
        %v894 = vadd.f32 %v805, %v893
        %v895 = vpop.f32.mrf.mxu0
        %v896 = vadd.f32 %v807, %v895
        %897 = vmatmul.bf16.gmra.mxu0 %v467
        %v898 = vpop.f32.mrf.mxu0
        %v899 = vadd.f32 %v810, %v898
        %v900 = vpop.f32.mrf.mxu0
        %v901 = vadd.f32 %v812, %v900
        %902 = vmatmul.bf16.gmra.mxu0 %v470
        %v903 = vpop.f32.mrf.mxu0
        %v904 = vadd.f32 %v815, %v903
        %v905 = vpop.f32.mrf.mxu0
        %v906 = vadd.f32 %v817, %v905
        %907 = vmatmul.bf16.gmra.mxu0 %v473
        %v908 = vpop.f32.mrf.mxu0
        %v909 = vadd.f32 %v820, %v908
        %v910 = vpop.f32.mrf.mxu0
        %v911 = vadd.f32 %v822, %v910
        %912 = vmatmul.bf16.gmra.mxu0 %v476
        %v913 = vpop.f32.mrf.mxu0
        %v914 = vadd.f32 %v825, %v913
        %v915 = vpop.f32.mrf.mxu0
        %v916 = vadd.f32 %v827, %v915
        %917 = vmatmul.bf16.gmra.mxu0 %v479
        %v918 = vpop.f32.mrf.mxu0
        %v919 = vadd.f32 %v830, %v918
        %v920 = vpop.f32.mrf.mxu0
        %v921 = vadd.f32 %v832, %v920
        %922 = vmatmul.bf16.gmra.mxu0 %v482
        %v923 = vpop.f32.mrf.mxu0
        %v924 = vadd.f32 %v835, %v923
        %v925 = vpop.f32.mrf.mxu0
        %v926 = vadd.f32 %v837, %v925
        %927 = vmatmul.bf16.gmra.mxu0 %v485
        %v928 = vpop.f32.mrf.mxu0
        %v929 = vadd.f32 %v840, %v928
        %v930 = vpop.f32.mrf.mxu0
        %v931 = vadd.f32 %v842, %v930
        %932 = vmatmul.bf16.gmra.mxu0 %v488
        %v933 = vpop.f32.mrf.mxu0
        %v934 = vadd.f32 %v845, %v933
        %v935 = vpop.f32.mrf.mxu0
        %v936 = vadd.f32 %v847, %v935
        %937 = vmatmul.bf16.gmra.mxu0 %v491
        %v938 = vpop.f32.mrf.mxu0
        %v939 = vadd.f32 %v850, %v938
        %v940 = vpop.f32.mrf.mxu0
        %v941 = vadd.f32 %v852, %v940
        %942 = vmatmul.bf16.gmra.mxu0 %v494
        %v943 = vpop.f32.mrf.mxu0
        %v944 = vadd.f32 %v855, %v943
        %v945 = vpop.f32.mrf.mxu0
        %v946 = vadd.f32 %v857, %v945
        %947 = vmatmul.bf16.gmra.mxu0 %v497
        %v948 = vpop.f32.mrf.mxu0
        %v949 = vadd.f32 %v860, %v948
        %v950 = vpop.f32.mrf.mxu0
        %v951 = vadd.f32 %v862, %v950
        %952 = vmatmul.bf16.gmra.mxu0 %v500
        %v953 = vpop.f32.mrf.mxu0
        %v954 = vadd.f32 %v865, %v953
        %v955 = vpop.f32.mrf.mxu0
        %v956 = vadd.f32 %v867, %v955
        %957 = vmatmul.bf16.gmra.mxu0 %v503
        %v958 = vpop.f32.mrf.mxu0
        %v959 = vadd.f32 %v870, %v958
        %v960 = vpop.f32.mrf.mxu0
        %v961 = vadd.f32 %v872, %v960
        %962 = vdwg.mxu0
        %v963 = vpack.c.bf16 %v884, %v884
        %v964 = vpack.c.bf16 %v886, %v886
        %v965 = vpack.c.bf16 %v889, %v889
        %v966 = vpack.c.bf16 %v891, %v891
        %v967 = vpack.c.bf16 %v894, %v894
        %v968 = vpack.c.bf16 %v896, %v896
        %v969 = vpack.c.bf16 %v899, %v899
        %v970 = vpack.c.bf16 %v901, %v901
        %v971 = vpack.c.bf16 %v904, %v904
        %v972 = vpack.c.bf16 %v906, %v906
        %v973 = vpack.c.bf16 %v909, %v909
        %v974 = vpack.c.bf16 %v911, %v911
        %v975 = vpack.c.bf16 %v914, %v914
        %v976 = vpack.c.bf16 %v916, %v916
        %v977 = vpack.c.bf16 %v919, %v919
        %v978 = vpack.c.bf16 %v921, %v921
        %v979 = vpack.c.bf16 %v924, %v924
        %v980 = vpack.c.bf16 %v926, %v926
        %v981 = vpack.c.bf16 %v929, %v929
        %v982 = vpack.c.bf16 %v931, %v931
        %v983 = vpack.c.bf16 %v934, %v934
        %v984 = vpack.c.bf16 %v936, %v936
        %v985 = vpack.c.bf16 %v939, %v939
        %v986 = vpack.c.bf16 %v941, %v941
        %v987 = vpack.c.bf16 %v944, %v944
        %v988 = vpack.c.bf16 %v946, %v946
        %v989 = vpack.c.bf16 %v949, %v949
        %v990 = vpack.c.bf16 %v951, %v951
        %v991 = vpack.c.bf16 %v954, %v954
        %v992 = vpack.c.bf16 %v956, %v956
        %v993 = vpack.c.bf16 %v959, %v959
        %v994 = vpack.c.bf16 %v961, %v961
        %995 = vst [vmem:[%s181] sm:$0xf] %v963
        %996 = vst [vmem:[%s181 + $0x4] sm:$0xf] %v964
        %997 = vst [vmem:[%s181 + $0x8] sm:$0xf] %v965
        %998 = vst [vmem:[%s181 + $0xc] sm:$0xf] %v966
        %999 = vst [vmem:[%s181 + $0x10] sm:$0xf] %v967
        %1000 = vst [vmem:[%s181 + $0x14] sm:$0xf] %v968
        %1001 = vst [vmem:[%s181 + $0x18] sm:$0xf] %v969
        %1002 = vst [vmem:[%s181 + $0x1c] sm:$0xf] %v970
        %1003 = vst [vmem:[%s181 + $0x20] sm:$0xf] %v971
        %1004 = vst [vmem:[%s181 + $0x24] sm:$0xf] %v972
        %1005 = vst [vmem:[%s181 + $0x28] sm:$0xf] %v973
        %1006 = vst [vmem:[%s181 + $0x2c] sm:$0xf] %v974
        %1007 = vst [vmem:[%s181 + $0x30] sm:$0xf] %v975
        %1008 = vst [vmem:[%s181 + $0x34] sm:$0xf] %v976
        %1009 = vst [vmem:[%s181 + $0x38] sm:$0xf] %v977
        %1010 = vst [vmem:[%s181 + $0x3c] sm:$0xf] %v978
        %1011 = vst [vmem:[%s181 + $0x40] sm:$0xf] %v979
        %1012 = vst [vmem:[%s181 + $0x44] sm:$0xf] %v980
        %1013 = vst [vmem:[%s181 + $0x48] sm:$0xf] %v981
        %1014 = vst [vmem:[%s181 + $0x4c] sm:$0xf] %v982
        %1015 = vst [vmem:[%s181 + $0x50] sm:$0xf] %v983
        %1016 = vst [vmem:[%s181 + $0x54] sm:$0xf] %v984
        %1017 = vst [vmem:[%s181 + $0x58] sm:$0xf] %v985
        %1018 = vst [vmem:[%s181 + $0x5c] sm:$0xf] %v986
        %1019 = vst [vmem:[%s181 + $0x60] sm:$0xf] %v987
        %1020 = vst [vmem:[%s181 + $0x64] sm:$0xf] %v988
        %1021 = vst [vmem:[%s181 + $0x68] sm:$0xf] %v989
        %1022 = vst [vmem:[%s181 + $0x6c] sm:$0xf] %v990
        %1023 = vst [vmem:[%s181 + $0x70] sm:$0xf] %v991
        %1024 = vst [vmem:[%s181 + $0x74] sm:$0xf] %v992
        %1025 = vst [vmem:[%s181 + $0x78] sm:$0xf] %v993
        %1026 = vst [vmem:[%s181 + $0x7c] sm:$0xf] %v994
        %s1027 = sand.u32 %s75, 1
        %s1028 = scalar_lea.sflag [#allocation4], %s1027
        %s1029 = sand.u32 %s75, 1
        %s1030 = smul.addr %s1029, 128
        %s1031 = scalar_lea.vmem [#allocation7], %s1030
        // Predicated region
        $region37: #{tpu_custom_call.1} parent=27 // pred_check
          %p1032 = pneg %p85
        $region38: #{tpu_custom_call.1} parent=27 // pred_check_branch
          %1034 = sbr.rel (%p1032) target = $region40
        $region39: #{tpu_custom_call.1} parent=27 // pred_region
          %s1035 = smul.u32 32, %s20
          %1037 = vsyncadd %s1028, 0
          %s1038 = smul.addr %s1035, 4
          %s1039 = scalar_lea.hbm %s2, %s1038
          %s1040 = sshll.u32 %s1031, 4
          %s1041 = int_to_ptr.vmem [resolvable:$true] %s1040
          %s1042 = sshll.u32 %s1039, 4
          %s1043 = int_to_ptr.hbm [resolvable:$true] %s1042
          %1048 = dma.vmem_to_hbm [thread:$0]  %s1041, 2048, %s1043, %s1028, 64, 64, 4
        $region40: #{tpu_custom_call.1} parent=27 // pred_fallthru
          _
      $region28: #{tpu_custom_call.1} parent=5 // pred_fallthru
        _
      %p1049 = scmp.le.s32.totalorder 2, %s15
      // Predicated region
      $region41: #{tpu_custom_call.1} parent=5 // pred_check
        %p1050 = pneg %p1049
      $region42: #{tpu_custom_call.1} parent=5 // pred_check_branch
        %1052 = sbr.rel (%p1050) target = $region44
      $region43: #{tpu_custom_call.1} parent=5 // pred_region
        %s1053 = ssub.s32 %s15, 2
        // Predicated region
        $region45: #{tpu_custom_call.1} parent=43 // pred_check
          %p1054 = pneg %p91
        $region46: #{tpu_custom_call.1} parent=43 // pred_check_branch
          %1056 = sbr.rel (%p1054) target = $region48
        $region47: #{tpu_custom_call.1} parent=43 // pred_region
          %s1057 = sand.u32 %s76, 1
          %s1058 = scalar_lea.sflag [#allocation4], %s1057
          %s1059 = sand.u32 %s76, 1
          %s1060 = smul.addr %s1059, 128
          %s1061 = scalar_lea.vmem [#allocation7], %s1060
          %1063 = dma.done %s1058, 2048
        $region48: #{tpu_custom_call.1} parent=43 // pred_fallthru
          _
      $region44: #{tpu_custom_call.1} parent=5 // pred_fallthru
        _
    $region6: #{tpu_custom_call.1} parent=1 // loop_footer
      %s19 = sadd.s32 1, %s15
    $region7: #{tpu_custom_call.1} parent=1 // loop_footer_branch
      %14 = sbr.rel target = $region3
    $region8: #{tpu_custom_call.1} parent=1 // loop_exit
      _
    %1064 = vsyncpa [#allocation3], 1
    %s1065 = scalar_lea.sflag [#allocation3], 1
    %1066 = vsyncpa %s1065, 1
    %1067 = vsyncpa [#allocation6], 1
    %1068 = vsyncpa [#allocation4], 1
    %s1069 = scalar_lea.sflag [#allocation4], 1
    %1070 = vsyncpa %s1069, 1

</llo_original>
